<compile_context>
chip_gen: v7x
topology: tpu7x:2x2x1
jax: 0.10.0
libtpu: 0.0.40
codegen_flags: <defaults>
</compile_context>

<pallas_src>
from functools import partial

import jax
import jax.numpy as jnp
from jax import lax
from jax.experimental import pallas as pl
from jax.experimental.pallas import tpu as pltpu


def _wce_kernel(logits_ref, targets_ref, out_ref, *,
                num_classes, thresholds, class_weight, lam,
                valid_hw, r_blk, rb_per_shard, mask_tail):
    # logits_ref : (s_chunk, C, r_blk, 128)   targets_ref : (s_chunk, r_blk, 128)
    # out_ref    : (1, 128) lane-resident accumulator for this (b, shard).
    sh = pl.program_id(1)
    sc = pl.program_id(2)
    rc = pl.program_id(3)

    @pl.when(jnp.logical_and(sc == 0, rc == 0))
    def _():
        out_ref[...] = jnp.zeros_like(out_ref)

    t = targets_ref[...].astype(jnp.float32)               # (s_chunk, r_blk, 128)
    s_chunk = t.shape[0]

    hits = [t >= thr for thr in thresholds]                 # bool masks, reused below

    # Pass 1 over class slabs: running max + fused threshold class/weight gather.
    # Per-class ref slices avoid materializing the whole block as f32.
    z0 = logits_ref[:, 0].astype(jnp.float32)
    m = z0
    z_sel = z0
    if class_weight is not None:
        w_sel = jnp.full_like(t, class_weight[0])
    for c in range(1, num_classes):
        zc = logits_ref[:, c].astype(jnp.float32)
        m = jnp.maximum(m, zc)
        if c - 1 < len(thresholds):
            hit = hits[c - 1]
            z_sel = jnp.where(hit, zc, z_sel)
            if class_weight is not None:
                w_sel = jnp.where(hit, class_weight[c], w_sel)

    # Pass 2 over class slabs: sum of exp(z - m) (EUP), then log (EUP).
    se = jnp.zeros_like(m)
    for c in range(num_classes):
        se = se + jnp.exp(logits_ref[:, c].astype(jnp.float32) - m)
    lse = m + jnp.log(se)

    nll = lse - z_sel
    if class_weight is not None:
        nll = nll * w_sel

    if mask_tail:
        # Zero out pixels past H*W (lane padding and/or partial last row-block).
        row = lax.broadcasted_iota(jnp.int32, (r_blk, 128), 0)
        lane = lax.broadcasted_iota(jnp.int32, (r_blk, 128), 1)
        base = (sh * rb_per_shard + rc) * (r_blk * 128)
        pos = base + row * 128 + lane
        nll = jnp.where((pos < valid_hw)[None, :, :], nll, 0.0)

    # Reduce over sublanes (pixel rows) per sequence step, apply (1 + s*LAMBDA)
    # per s-slab, reduce over s — the cross-lane reduce is deferred to the wrapper.
    lane_part = jnp.sum(nll, axis=1)                         # (s_chunk, 128)
    if lam is not None:
        s_idx = (lax.broadcasted_iota(jnp.int32, (s_chunk, 128), 0)
                 + sc * s_chunk).astype(jnp.float32)
        lane_part = lane_part * (1.0 + lam * s_idx)
    out_ref[...] += jnp.sum(lane_part, axis=0, keepdims=True)   # (1, 128)


def _vmem_budget():
    """(target logits-block bytes, scoped-VMEM limit cap), generation aware."""
    vmem_phys = 128 * 1024 * 1024
    try:
        info = pltpu.get_tpu_info()
        vmem_phys = int(getattr(info, "vmem_capacity_bytes", vmem_phys))
    except Exception:
        pass                                   # interpret mode / no TPU info: v5e/v6e defaults
    if vmem_phys <= 64 * 1024 * 1024:          # v7x-class TensorCore (64 MiB VMEM)
        return 4 * 1024 * 1024, 44 * 1024 * 1024
    return 8 * 1024 * 1024, 96 * 1024 * 1024   # v5e / v6e (128 MiB physical VMEM)


def _pick_chunks(S, C, R, itemsize, target_bytes):
    """Choose (s_chunk dividing S, r_blk) so one logits block is ~<= target_bytes."""
    bytes_per_s = C * R * 128 * itemsize
    if bytes_per_s <= target_bytes:
        s_chunk = 1
        for d in range(1, S + 1):
            if S % d == 0 and d * bytes_per_s <= target_bytes:
                s_chunk = d
        return s_chunk, R                      # r_blk == R -> full-dim exception
    if R <= 8:
        return 1, R
    max_rows = max(8, target_bytes // (C * 128 * itemsize))
    return 1, min((max_rows // 8) * 8, R)      # multiple of 8; last block may be partial


def weighted_cross_entropy_loss(inputs, targets, thresholds, weight=None, LAMBDA=None):
    """inputs: (B, S, C, H, W); targets: (B, S, 1, H, W) -> scalar float32 loss."""
    B, S, C, H, W = inputs.shape
    assert targets.shape == (B, S, 1, H, W)
    thresholds = tuple(float(x) for x in thresholds)
    assert len(thresholds) <= C - 1, "need len(thresholds) < number of channels"

    HW = H * W
    HW128 = ((HW + 127) // 128) * 128
    logits = inputs.reshape(B, S, C, HW)
    tgt = targets.reshape(B, S, HW)
    if HW128 != HW:
        # TODO(synk): rare path (H*W not a multiple of 128) still costs one HBM pad copy.
        logits = jnp.pad(logits, ((0, 0), (0, 0), (0, 0), (0, HW128 - HW)))
        tgt = jnp.pad(tgt, ((0, 0), (0, 0), (0, HW128 - HW)))
    R = HW128 // 128
    # Trailing contiguous split: free (no HBM data movement).
    logits = logits.reshape(B, S, C, R, 128)
    tgt = tgt.reshape(B, S, R, 128)

    l_item = jnp.dtype(logits.dtype).itemsize
    t_item = jnp.dtype(tgt.dtype).itemsize

    target_bytes, vmem_cap = _vmem_budget()
    s_chunk, r_blk = _pick_chunks(S, C, R, l_item, target_bytes)

    n_rb = (R + r_blk - 1) // r_blk
    # Extra parallel axis over row-block shards so both v7x TensorCores stay busy
    # even when B is small (no-op on single-TC v5e/v6e). Only used when it divides.
    n_shards = 2 if (n_rb >= 2 and n_rb % 2 == 0) else 1
    rb_per_shard = n_rb // n_shards

    mask_tail = (n_rb * r_blk * 128 != HW)

    grid = (B, n_shards, S // s_chunk, rb_per_shard)

    kernel = partial(
        _wce_kernel,
        num_classes=C,
        thresholds=thresholds,
        class_weight=None if weight is None else tuple(float(x) for x in weight),
        lam=None if LAMBDA is None else float(LAMBDA),
        valid_hw=HW,
        r_blk=r_blk,
        rb_per_shard=rb_per_shard,
        mask_tail=mask_tail,
    )

    blk_bytes = s_chunk * r_blk * 128 * (C * l_item + t_item)
    vmem_limit = int(min(vmem_cap, max(32 * 1024 * 1024, 4 * blk_bytes + (8 << 20))))

    cost = pl.CostEstimate(
        flops=int(B * S * R * 128 * (5 * C + 4 * len(thresholds) + 8)),
        transcendentals=int(B * S * R * 128 * (C + 1)),
        bytes_accessed=int(logits.size * l_item + tgt.size * t_item
                           + B * n_shards * 128 * 4),
    )

    partial_sums = pl.pallas_call(
        kernel,
        out_shape=jax.ShapeDtypeStruct((B, n_shards, 1, 128), jnp.float32),
        grid=grid,
        in_specs=[
            pl.BlockSpec((None, s_chunk, C, r_blk, 128),
                         lambda b, sh, s, r: (b, s, 0, sh * rb_per_shard + r, 0)),
            pl.BlockSpec((None, s_chunk, r_blk, 128),
                         lambda b, sh, s, r: (b, s, sh * rb_per_shard + r, 0)),
        ],
        out_specs=pl.BlockSpec((None, None, 1, 128),
                               lambda b, sh, s, r: (b, sh, 0, 0)),
        compiler_params=pltpu.CompilerParams(
            dimension_semantics=("parallel", "parallel", "arbitrary", "arbitrary"),
            vmem_limit_bytes=vmem_limit,
        ),
        cost_estimate=cost,
    )(logits, tgt)

    total = jnp.sum(partial_sums)                 # lane + (b, shard) reduce, once
    return (total / jnp.float32(B * S * H * W)).astype(jnp.float32)


def _reference_loss(inputs, targets, thresholds, weight, LAMBDA):
    """Pure-JAX re-implementation of the torch forward, for validation."""
    x = jnp.transpose(inputs, (0, 2, 1, 3, 4))       # (B, C, S, H, W)
    t = jnp.squeeze(targets, 2)                      # (B, S, H, W)
    cls = jnp.zeros(t.shape, jnp.int32)
    for i, thr in enumerate(thresholds):
        cls = jnp.where(t >= thr, i + 1, cls)
    logp = jax.nn.log_softmax(x, axis=1)
    nll = -jnp.take_along_axis(logp, cls[:, None], axis=1)[:, 0]   # (B, S, H, W)
    if weight is not None:
        w = jnp.asarray(weight, jnp.float32)
        nll = nll * w[cls]
    if LAMBDA is not None:
        S = nll.shape[1]
        ws = 1.0 + LAMBDA * jnp.arange(S, dtype=jnp.float32)
        nll = nll * ws[None, :, None, None]
    return jnp.mean(nll.astype(jnp.float32))


if __name__ == "__main__":
    key = jax.random.PRNGKey(0)
    B, S, C, H, W = 2, 8, 4, 16, 16
    thresholds = (0.25, 0.5, 0.75)          # -> 4 classes, matches C
    weight = (1.0, 2.0, 3.0, 4.0)
    LAMBDA = 0.1

    k1, k2 = jax.random.split(key)
    inputs = jax.random.normal(k1, (B, S, C, H, W), dtype=jnp.float32)
    targets = jax.random.uniform(k2, (B, S, 1, H, W), dtype=jnp.float32)

    out = weighted_cross_entropy_loss(inputs, targets, thresholds, weight, LAMBDA)
    out = jax.block_until_ready(out)

    ref = _reference_loss(inputs, targets, thresholds, weight, LAMBDA)
    assert jnp.allclose(out, ref, rtol=1e-5, atol=1e-5), (out, ref)

    print("KERNEL_OK")
</pallas_src>

<mosaic_0001>
module attributes {stable_mosaic.version = 11 : i64} {
  func.func @_wce_kernel(%arg0: i32, %arg1: i32, %arg2: i32, %arg3: i32, %arg4: memref<1x8x4x2x128xf32, #tpu.memory_space<vmem>>, %arg5: memref<1x8x2x128xf32, #tpu.memory_space<vmem>>, %arg6: memref<1x1x1x128xf32, #tpu.memory_space<vmem>>) attributes {dimension_semantics = [#tpu.dimension_semantics<parallel>, #tpu.dimension_semantics<parallel>, #tpu.dimension_semantics<arbitrary>, #tpu.dimension_semantics<arbitrary>], iteration_bounds = array<i64: 2, 1, 1, 1>, scalar_prefetch = 0 : i64, scratch_operands = 0 : i64, tpu.core_type = #tpu.core_type<tc>, window_params = [{transform_indices = @transform_0, window_bounds = array<i64: 1, 8, 4, 2, 128>}, {transform_indices = @transform_1, window_bounds = array<i64: 1, 8, 2, 128>}, {transform_indices = @transform_2, window_bounds = array<i64: 1, 1, 1, 128>}]} {
    %c0_i32 = arith.constant 0 : i32
    %0 = arith.cmpi eq, %arg2, %c0_i32 : i32
    %c0_i32_0 = arith.constant 0 : i32
    %1 = arith.cmpi eq, %arg3, %c0_i32_0 : i32
    %2 = arith.andi %0, %1 : i1
    %3 = arith.extui %2 : i1 to i32
    %c0_i32_1 = arith.constant 0 : i32
    %4 = arith.cmpi ne, %3, %c0_i32_1 : i32
    scf.if %4 {
      %cst_61 = arith.constant 0.000000e+00 : f32
      %78 = vector.broadcast %cst_61 : f32 to vector<1x128xf32>
      %c0_62 = arith.constant 0 : index
      %c0_63 = arith.constant 0 : index
      %c0_64 = arith.constant 0 : index
      %c0_65 = arith.constant 0 : index
      %79 = vector.load %arg6[%c0_62, %c0_63, %c0_64, %c0_65] : memref<1x1x1x128xf32, #tpu.memory_space<vmem>>, vector<1x1x1x128xf32>
      %80 = vector.shape_cast %79 : vector<1x1x1x128xf32> to vector<1x128xf32>
      %81 = vector.shape_cast %78 : vector<1x128xf32> to vector<1x1x1x128xf32>
      tpu.vector_store %arg6[%c0_62, %c0_63, %c0_64, %c0_65], %81 {strides = array<i32>} : memref<1x1x1x128xf32, #tpu.memory_space<vmem>>, vector<1x1x1x128xf32>,
    } else {
    }
    %c0 = arith.constant 0 : index
    %c0_2 = arith.constant 0 : index
    %c0_3 = arith.constant 0 : index
    %c0_4 = arith.constant 0 : index
    %5 = vector.load %arg5[%c0, %c0_2, %c0_3, %c0_4] : memref<1x8x2x128xf32, #tpu.memory_space<vmem>>, vector<1x8x2x128xf32>
    %6 = vector.shape_cast %5 : vector<1x8x2x128xf32> to vector<8x2x128xf32>
    %cst = arith.constant 2.500000e-01 : f32
    %7 = vector.broadcast %cst : f32 to vector<8x2x128xf32>
    %8 = arith.cmpf oge, %6, %7 : vector<8x2x128xf32>
    %cst_5 = arith.constant 5.000000e-01 : f32
    %9 = vector.broadcast %cst_5 : f32 to vector<8x2x128xf32>
    %10 = arith.cmpf oge, %6, %9 : vector<8x2x128xf32>
    %cst_6 = arith.constant 7.500000e-01 : f32
    %11 = vector.broadcast %cst_6 : f32 to vector<8x2x128xf32>
    %12 = arith.cmpf oge, %6, %11 : vector<8x2x128xf32>
    %c0_7 = arith.constant 0 : index
    %c0_8 = arith.constant 0 : index
    %c0_9 = arith.constant 0 : index
    %c0_10 = arith.constant 0 : index
    %c0_11 = arith.constant 0 : index
    %13 = vector.load %arg4[%c0_7, %c0_8, %c0_9, %c0_10, %c0_11] : memref<1x8x4x2x128xf32, #tpu.memory_space<vmem>>, vector<1x8x1x2x128xf32>
    %14 = vector.shape_cast %13 : vector<1x8x1x2x128xf32> to vector<8x2x128xf32>
    %cst_12 = arith.constant 1.000000e+00 : f32
    %15 = vector.broadcast %cst_12 : f32 to vector<8x2x128xf32>
    %c0_13 = arith.constant 0 : index
    %c0_14 = arith.constant 0 : index
    %c1 = arith.constant 1 : index
    %c0_15 = arith.constant 0 : index
    %c0_16 = arith.constant 0 : index
    %16 = vector.load %arg4[%c0_13, %c0_14, %c1, %c0_15, %c0_16] : memref<1x8x4x2x128xf32, #tpu.memory_space<vmem>>, vector<1x8x1x2x128xf32>
    %17 = vector.shape_cast %16 : vector<1x8x1x2x128xf32> to vector<8x2x128xf32>
    %18 = arith.maximumf %14, %17 : vector<8x2x128xf32>
    %19 = arith.select %8, %17, %14 : vector<8x2x128xi1>, vector<8x2x128xf32>
    %cst_17 = arith.constant 2.000000e+00 : f32
    %20 = vector.broadcast %cst_17 : f32 to vector<8x2x128xf32>
    %21 = arith.select %8, %20, %15 : vector<8x2x128xi1>, vector<8x2x128xf32>
    %c0_18 = arith.constant 0 : index
    %c0_19 = arith.constant 0 : index
    %c2 = arith.constant 2 : index
    %c0_20 = arith.constant 0 : index
    %c0_21 = arith.constant 0 : index
    %22 = vector.load %arg4[%c0_18, %c0_19, %c2, %c0_20, %c0_21] : memref<1x8x4x2x128xf32, #tpu.memory_space<vmem>>, vector<1x8x1x2x128xf32>
    %23 = vector.shape_cast %22 : vector<1x8x1x2x128xf32> to vector<8x2x128xf32>
    %24 = arith.maximumf %18, %23 : vector<8x2x128xf32>
    %25 = arith.select %10, %23, %19 : vector<8x2x128xi1>, vector<8x2x128xf32>
    %cst_22 = arith.constant 3.000000e+00 : f32
    %26 = vector.broadcast %cst_22 : f32 to vector<8x2x128xf32>
    %27 = arith.select %10, %26, %21 : vector<8x2x128xi1>, vector<8x2x128xf32>
    %c0_23 = arith.constant 0 : index
    %c0_24 = arith.constant 0 : index
    %c3 = arith.constant 3 : index
    %c0_25 = arith.constant 0 : index
    %c0_26 = arith.constant 0 : index
    %28 = vector.load %arg4[%c0_23, %c0_24, %c3, %c0_25, %c0_26] : memref<1x8x4x2x128xf32, #tpu.memory_space<vmem>>, vector<1x8x1x2x128xf32>
    %29 = vector.shape_cast %28 : vector<1x8x1x2x128xf32> to vector<8x2x128xf32>
    %30 = arith.maximumf %24, %29 : vector<8x2x128xf32>
    %31 = arith.select %12, %29, %25 : vector<8x2x128xi1>, vector<8x2x128xf32>
    %cst_27 = arith.constant 4.000000e+00 : f32
    %32 = vector.broadcast %cst_27 : f32 to vector<8x2x128xf32>
    %33 = arith.select %12, %32, %27 : vector<8x2x128xi1>, vector<8x2x128xf32>
    %cst_28 = arith.constant 0.000000e+00 : f32
    %34 = vector.broadcast %cst_28 : f32 to vector<8x2x128xf32>
    %c0_29 = arith.constant 0 : index
    %c0_30 = arith.constant 0 : index
    %c0_31 = arith.constant 0 : index
    %c0_32 = arith.constant 0 : index
    %c0_33 = arith.constant 0 : index
    %35 = vector.load %arg4[%c0_29, %c0_30, %c0_31, %c0_32, %c0_33] : memref<1x8x4x2x128xf32, #tpu.memory_space<vmem>>, vector<1x8x1x2x128xf32>
    %36 = vector.shape_cast %35 : vector<1x8x1x2x128xf32> to vector<8x2x128xf32>
    %37 = arith.subf %36, %30 : vector<8x2x128xf32>
    %38 = math.exp %37 : vector<8x2x128xf32>
    %39 = arith.addf %34, %38 : vector<8x2x128xf32>
    %c0_34 = arith.constant 0 : index
    %c0_35 = arith.constant 0 : index
    %c1_36 = arith.constant 1 : index
    %c0_37 = arith.constant 0 : index
    %c0_38 = arith.constant 0 : index
    %40 = vector.load %arg4[%c0_34, %c0_35, %c1_36, %c0_37, %c0_38] : memref<1x8x4x2x128xf32, #tpu.memory_space<vmem>>, vector<1x8x1x2x128xf32>
    %41 = vector.shape_cast %40 : vector<1x8x1x2x128xf32> to vector<8x2x128xf32>
    %42 = arith.subf %41, %30 : vector<8x2x128xf32>
    %43 = math.exp %42 : vector<8x2x128xf32>
    %44 = arith.addf %39, %43 : vector<8x2x128xf32>
    %c0_39 = arith.constant 0 : index
    %c0_40 = arith.constant 0 : index
    %c2_41 = arith.constant 2 : index
    %c0_42 = arith.constant 0 : index
    %c0_43 = arith.constant 0 : index
    %45 = vector.load %arg4[%c0_39, %c0_40, %c2_41, %c0_42, %c0_43] : memref<1x8x4x2x128xf32, #tpu.memory_space<vmem>>, vector<1x8x1x2x128xf32>
    %46 = vector.shape_cast %45 : vector<1x8x1x2x128xf32> to vector<8x2x128xf32>
    %47 = arith.subf %46, %30 : vector<8x2x128xf32>
    %48 = math.exp %47 : vector<8x2x128xf32>
    %49 = arith.addf %44, %48 : vector<8x2x128xf32>
    %c0_44 = arith.constant 0 : index
    %c0_45 = arith.constant 0 : index
    %c3_46 = arith.constant 3 : index
    %c0_47 = arith.constant 0 : index
    %c0_48 = arith.constant 0 : index
    %50 = vector.load %arg4[%c0_44, %c0_45, %c3_46, %c0_47, %c0_48] : memref<1x8x4x2x128xf32, #tpu.memory_space<vmem>>, vector<1x8x1x2x128xf32>
    %51 = vector.shape_cast %50 : vector<1x8x1x2x128xf32> to vector<8x2x128xf32>
    %52 = arith.subf %51, %30 : vector<8x2x128xf32>
    %53 = math.exp %52 : vector<8x2x128xf32>
    %54 = arith.addf %49, %53 : vector<8x2x128xf32>
    %55 = math.log %54 : vector<8x2x128xf32>
    %56 = arith.addf %30, %55 : vector<8x2x128xf32>
    %57 = arith.subf %56, %31 : vector<8x2x128xf32>
    %58 = arith.mulf %57, %33 : vector<8x2x128xf32>
    %cst_49 = arith.constant dense<0.000000e+00> : vector<8x128xf32>
    %59 = vector.multi_reduction <add>, %58, %cst_49 [1] : vector<8x2x128xf32> to vector<8x128xf32>
    %60 = tpu.iota {dimensions = array<i32: 0>} : vector<8x128xi32>
    %c8_i32 = arith.constant 8 : i32
    %61 = arith.muli %arg2, %c8_i32 : i32
    %62 = vector.broadcast %61 : i32 to vector<8x128xi32>
    %63 = arith.addi %60, %62 : vector<8x128xi32>
    %64 = arith.sitofp %63 : vector<8x128xi32> to vector<8x128xf32>
    %cst_50 = arith.constant 1.000000e-01 : f32
    %65 = vector.broadcast %cst_50 : f32 to vector<8x128xf32>
    %66 = arith.mulf %65, %64 : vector<8x128xf32>
    %cst_51 = arith.constant 1.000000e+00 : f32
    %67 = vector.broadcast %cst_51 : f32 to vector<8x128xf32>
    %68 = arith.addf %67, %66 : vector<8x128xf32>
    %69 = arith.mulf %59, %68 : vector<8x128xf32>
    %c0_52 = arith.constant 0 : index
    %c0_53 = arith.constant 0 : index
    %c0_54 = arith.constant 0 : index
    %c0_55 = arith.constant 0 : index
    %70 = vector.load %arg6[%c0_52, %c0_53, %c0_54, %c0_55] : memref<1x1x1x128xf32, #tpu.memory_space<vmem>>, vector<1x1x1x128xf32>
    %71 = vector.shape_cast %70 : vector<1x1x1x128xf32> to vector<1x128xf32>
    %cst_56 = arith.constant dense<0.000000e+00> : vector<128xf32>
    %72 = vector.multi_reduction <add>, %69, %cst_56 [0] : vector<8x128xf32> to vector<128xf32>
    %73 = vector.shape_cast %72 : vector<128xf32> to vector<1x128xf32>
    %74 = arith.addf %71, %73 : vector<1x128xf32>
    %c0_57 = arith.constant 0 : index
    %c0_58 = arith.constant 0 : index
    %c0_59 = arith.constant 0 : index
    %c0_60 = arith.constant 0 : index
    %75 = vector.load %arg6[%c0_57, %c0_58, %c0_59, %c0_60] : memref<1x1x1x128xf32, #tpu.memory_space<vmem>>, vector<1x1x1x128xf32>
    %76 = vector.shape_cast %75 : vector<1x1x1x128xf32> to vector<1x128xf32>
    %77 = vector.shape_cast %74 : vector<1x128xf32> to vector<1x1x1x128xf32>
    tpu.vector_store %arg6[%c0_57, %c0_58, %c0_59, %c0_60], %77 {strides = array<i32>} : memref<1x1x1x128xf32, #tpu.memory_space<vmem>>, vector<1x1x1x128xf32>,
    return
  }
  func.func @transform_0(%arg0: i32, %arg1: i32, %arg2: i32, %arg3: i32) -> (i32, i32, i32, i32, i32) {
    %c1_i32 = arith.constant 1 : i32
    %0 = arith.muli %arg1, %c1_i32 : i32
    %1 = arith.addi %0, %arg3 : i32
    %c0_i32 = arith.constant 0 : i32
    %c0_i32_0 = arith.constant 0 : i32
    %c0_i32_1 = arith.constant 0 : i32
    return %arg0, %arg2, %c0_i32, %1, %c0_i32_0 : i32, i32, i32, i32, i32
  }
  func.func @transform_1(%arg0: i32, %arg1: i32, %arg2: i32, %arg3: i32) -> (i32, i32, i32, i32) {
    %c1_i32 = arith.constant 1 : i32
    %0 = arith.muli %arg1, %c1_i32 : i32
    %1 = arith.addi %0, %arg3 : i32
    %c0_i32 = arith.constant 0 : i32
    %c0_i32_0 = arith.constant 0 : i32
    return %arg0, %arg2, %1, %c0_i32 : i32, i32, i32, i32
  }
  func.func @transform_2(%arg0: i32, %arg1: i32, %arg2: i32, %arg3: i32) -> (i32, i32, i32, i32) {
    %c0_i32 = arith.constant 0 : i32
    %c0_i32_0 = arith.constant 0 : i32
    %c0_i32_1 = arith.constant 0 : i32
    return %arg0, %arg1, %c0_i32, %c0_i32_0 : i32, i32, i32, i32
  }
}

</mosaic_0001>

<llo_original>
// kernel: tpu_custom_call.1
$region0: #{tpu_custom_call.1}
  #allocation0 [shape = 'u32[]', space=smem, size = 0x4, offset = 0x4, fixed_abs, tag = 'smem constant byte address 0x4 - core index']
  #allocation1 [shape = 'u32[144,128]{1,0:T(1,128)}', space=vmem, size = 0x12000, scoped, tag = 'internal scratch']
  %s0 = inlined_call_operand.hbm [shape: f32[2,8,4,2,128], index: 0, kind: input, shape index: {}]
  %s1 = inlined_call_operand.hbm [shape: f32[2,8,2,128], index: 1, kind: input, shape index: {}]
  %s2 = inlined_call_operand.hbm [shape: f32[2,1,1,128], index: 2, kind: output, shape index: {}]
  %s3 = sld [smem:[#allocation0]]
  $region53: #{tpu_custom_call.1} parent=0
    _
  %s5 = ssub.s32 1, %s3
  %s6 = scalar_select 0, %s5, %s3
  $region1: #{tpu_custom_call.1} parent=0
    #allocation2 [shape = 'u8[65536]{0}', space=vmem, size = 0x10000, scoped, tag = 'input window, operand 0']
    #allocation3 [shape = 's32[2]{0}', space=sflag, size = 0x8, scoped, tag = 'scoped memory for tpu_custom_call.1']
    #allocation4 [shape = 's32[2]{0}', space=sflag, size = 0x8, scoped, tag = 'scoped memory for tpu_custom_call.1']
    #allocation5 [shape = 'u8[16384]{0}', space=vmem, size = 0x4000, scoped, tag = 'input window, operand 1']
    #allocation6 [shape = 's32[2]{0}', space=sflag, size = 0x8, scoped, tag = 'scoped memory for tpu_custom_call.1']
    #allocation7 [shape = 'u8[1024]{0}', space=vmem, size = 0x400, scoped, tag = 'output window, operand 0']
    %7 = vsyncpa [#allocation3], 0
    %s8 = scalar_lea.sflag [#allocation3], 1
    %9 = vsyncpa %s8, 0
    %10 = vsyncpa [#allocation6], 0
    %s11 = scalar_lea.sflag [#allocation6], 1
    %12 = vsyncpa %s11, 0
    %13 = vsyncpa [#allocation4], 0
    %s14 = scalar_lea.sflag [#allocation4], 1
    %15 = vsyncpa %s14, 0
    loop: start=0, step=1, limit=4
    $region2: #{tpu_custom_call.1} parent=1 // loop_pre_header
      _
    $region3: #{tpu_custom_call.1} parent=1 // loop_header
      %s17 = sphi 0, %s21
      %p18 = scmp.ge.s32.totalorder %s17, 4
      %s24 = sphi 0, %s50
      %s25 = sphi 0, %s46
      %s26 = sphi 0, %s42
      %s27 = sphi 0, %s38
      %s28 = sphi 0, %s24
      %s29 = sphi 0, %s25
      %s30 = sphi 0, %s26
      %s31 = sphi 0, %s27
      %s32 = sphi 0, %s28
      %s33 = sphi 0, %s29
      %s34 = sphi 0, %s30
      %s35 = sphi 0, %s31
      %s59 = sphi 0, %s61
      %s62 = sphi 0, %s59
      %s63 = sphi 0, %s62
      %s79 = sphi 0, %s63
      %s91 = sphi 0, %s93
      %s94 = sphi 0, %s91
      %s95 = sphi 0, %s94
      %s111 = sphi 0, %s95
      %s119 = sphi 0, %s121
      %s122 = sphi 0, %s119
      %s123 = sphi 0, %s122
      %s139 = sphi 0, %s123
    $region4: #{tpu_custom_call.1} parent=1 // loop_header_branch
      %20 = sbr.rel (%p18) target = $region8
    $region5: #{tpu_custom_call.1} parent=1 // loop_body
      %s22 = ssub.s32 %s17, 1
      %s23 = ssub.s32 %s17, 2
      %s36 = sadd.s32 1, %s27
      %p37 = scmp.ge.s32.totalorder %s36, 1
      %s38 = scalar_select %p37, 0, %s36
      %s39 = sadd.s32 1, %s26
      %s40 = scalar_select %p37, %s39, %s26
      %p41 = scmp.ge.s32.totalorder %s40, 1
      %s42 = scalar_select %p41, 0, %s40
      %s43 = sadd.s32 1, %s25
      %s44 = scalar_select %p41, %s43, %s25
      %p45 = scmp.ge.s32.totalorder %s44, 1
      %s46 = scalar_select %p45, 0, %s44
      %s47 = sadd.s32 1, %s24
      %s48 = scalar_select %p45, %s47, %s24
      %p49 = scmp.ge.s32.totalorder %s48, 2
      %s50 = scalar_select %p49, 0, %s48
      %s51 = sadd.s32 %s25, %s27
      %s52 = sadd.s32 %s46, %s38
      %s53 = ssub.s32 %s24, %s50
      %s54 = ssub.s32 %s26, %s42
      %s55 = sor.u32 %s53, %s54
      %s56 = ssub.s32 %s51, %s52
      %s57 = sor.u32 %s55, %s56
      %p58 = scmp.eq.s32.totalorder %s57, 0
      %s60 = sadd.s32 %s59, 1
      %s61 = scalar_select %p58, %s59, %s60
      %p64 = pneg %p58
      %p65 = scmp.eq.s32.totalorder %s17, 1
      %p66 = por %p64, %p65
      %p67 = scmp.ne.s32.totalorder %s59, %s62
      %p68 = scmp.eq.s32.totalorder %s17, 0
      %p69 = por %p67, %p68
      %p70 = scmp.ne.s32.totalorder %s59, %s62
      %p71 = scmp.eq.s32.totalorder %s22, 1
      %p72 = por %p70, %p71
      %p73 = scmp.ne.s32.totalorder %s62, %s63
      %p74 = scmp.eq.s32.totalorder %s22, 0
      %p75 = por %p73, %p74
      %p76 = scmp.ne.s32.totalorder %s62, %s63
      %p77 = scmp.eq.s32.totalorder %s23, 1
      %p78 = por %p76, %p77
      %p80 = scmp.ne.s32.totalorder %s63, %s79
      %p81 = scmp.eq.s32.totalorder %s23, 0
      %p82 = por %p80, %p81
      %s83 = sadd.s32 %s25, %s27
      %s84 = sadd.s32 %s46, %s38
      %s85 = ssub.s32 %s24, %s50
      %s86 = ssub.s32 %s26, %s42
      %s87 = sor.u32 %s85, %s86
      %s88 = ssub.s32 %s83, %s84
      %s89 = sor.u32 %s87, %s88
      %p90 = scmp.eq.s32.totalorder %s89, 0
      %s92 = sadd.s32 %s91, 1
      %s93 = scalar_select %p90, %s91, %s92
      %p96 = pneg %p90
      %p97 = scmp.eq.s32.totalorder %s17, 1
      %p98 = por %p96, %p97
      %p99 = scmp.ne.s32.totalorder %s91, %s94
      %p100 = scmp.eq.s32.totalorder %s17, 0
      %p101 = por %p99, %p100
      %p102 = scmp.ne.s32.totalorder %s91, %s94
      %p103 = scmp.eq.s32.totalorder %s22, 1
      %p104 = por %p102, %p103
      %p105 = scmp.ne.s32.totalorder %s94, %s95
      %p106 = scmp.eq.s32.totalorder %s22, 0
      %p107 = por %p105, %p106
      %p108 = scmp.ne.s32.totalorder %s94, %s95
      %p109 = scmp.eq.s32.totalorder %s23, 1
      %p110 = por %p108, %p109
      %p112 = scmp.ne.s32.totalorder %s95, %s111
      %p113 = scmp.eq.s32.totalorder %s23, 0
      %p114 = por %p112, %p113
      %s115 = ssub.s32 %s24, %s50
      %s116 = ssub.s32 %s25, %s46
      %s117 = sor.u32 %s115, %s116
      %p118 = scmp.eq.s32.totalorder %s117, 0
      %s120 = sadd.s32 %s119, 1
      %s121 = scalar_select %p118, %s119, %s120
      %p124 = pneg %p118
      %p125 = scmp.eq.s32.totalorder %s17, 1
      %p126 = por %p124, %p125
      %p127 = scmp.ne.s32.totalorder %s119, %s122
      %p128 = scmp.eq.s32.totalorder %s17, 0
      %p129 = por %p127, %p128
      %p130 = scmp.ne.s32.totalorder %s119, %s122
      %p131 = scmp.eq.s32.totalorder %s22, 1
      %p132 = por %p130, %p131
      %p133 = scmp.ne.s32.totalorder %s122, %s123
      %p134 = scmp.eq.s32.totalorder %s22, 0
      %p135 = por %p133, %p134
      %p136 = scmp.ne.s32.totalorder %s122, %s123
      %p137 = scmp.eq.s32.totalorder %s23, 1
      %p138 = por %p136, %p137
      %p140 = scmp.ne.s32.totalorder %s123, %s139
      %p141 = scmp.eq.s32.totalorder %s23, 0
      %p142 = por %p140, %p141
      %p143 = scmp.le.s32.totalorder 1, %s17
      %p144 = scmp.lt.s32.totalorder %s17, 3
      %p145 = pnand %p143, %p144
      %p146 = pneg %p145
      // Predicated region
      $region9: #{tpu_custom_call.1} parent=5 // pred_check
        _
      $region10: #{tpu_custom_call.1} parent=5 // pred_check_branch
        %148 = sbr.rel (%p145) target = $region12
      $region11: #{tpu_custom_call.1} parent=5 // pred_region
        %s149 = ssub.s32 %s17, 1
      $region12: #{tpu_custom_call.1} parent=5 // pred_fallthru
        _
      %p150 = scmp.lt.s32.totalorder %s17, 2
      // Predicated region
      $region13: #{tpu_custom_call.1} parent=5 // pred_check
        %p151 = pneg %p150
      $region14: #{tpu_custom_call.1} parent=5 // pred_check_branch
        %153 = sbr.rel (%p151) target = $region16
      $region15: #{tpu_custom_call.1} parent=5 // pred_region
        // Predicated region
        $region17: #{tpu_custom_call.1} parent=15 // pred_check
          %p154 = pneg %p69
        $region18: #{tpu_custom_call.1} parent=15 // pred_check_branch
          %156 = sbr.rel (%p154) target = $region20
        $region19: #{tpu_custom_call.1} parent=15 // pred_region
          %s157 = sand.u32 %s59, 1
          %s158 = scalar_lea.sflag [#allocation3], %s157
          %s159 = sand.u32 %s59, 1
          %s160 = smul.addr %s159, 64
          %s161 = scalar_lea.vmem [#allocation2], %s160
          %s162 = sadd.s32 %s25, %s27
          %s163 = smul.u32 8, %s26
          %s165 = ssub.s32 1024, 1024
          %166 = vsyncadd %s158, %s165
          %s167 = smul.addr %s163, 4
          %s168 = sadd.s32 %s162, %s167
          %s169 = smul.addr %s24, 32
          %s170 = sadd.s32 %s168, %s169
          %s171 = smul.addr %s170, 32
          %s172 = scalar_lea.hbm %s0, %s171
          %s173 = sshll.u32 %s161, 4
          %s174 = int_to_ptr.vmem [resolvable:$true] %s173
          %179 = dma.hbm_to_vmem [thread:$0]  %s172, 1024, %s174, %s158, 32, 32, 2
        $region20: #{tpu_custom_call.1} parent=15 // pred_fallthru
          _
        // Predicated region
        $region21: #{tpu_custom_call.1} parent=15 // pred_check
          %p180 = pneg %p101
        $region22: #{tpu_custom_call.1} parent=15 // pred_check_branch
          %182 = sbr.rel (%p180) target = $region24
        $region23: #{tpu_custom_call.1} parent=15 // pred_region
          %s183 = sand.u32 %s91, 1
          %s184 = scalar_lea.sflag [#allocation6], %s183
          %s185 = sand.u32 %s91, 1
          %s186 = smul.addr %s185, 16
          %s187 = scalar_lea.vmem [#allocation5], %s186
          %s188 = sadd.s32 %s25, %s27
          %s189 = smul.u32 8, %s26
          %s191 = ssub.s32 256, 256
          %192 = vsyncadd %s184, %s191
          %s193 = sadd.s32 %s188, %s189
          %s194 = smul.addr %s24, 8
          %s195 = sadd.s32 %s193, %s194
          %s196 = smul.addr %s195, 32
          %s197 = scalar_lea.hbm %s1, %s196
          %s198 = sshll.u32 %s187, 4
          %s199 = int_to_ptr.vmem [resolvable:$true] %s198
          %204 = dma.hbm_to_vmem [thread:$0]  %s197, 256, %s199, %s184, 32, 32, 2
        $region24: #{tpu_custom_call.1} parent=15 // pred_fallthru
          _
      $region16: #{tpu_custom_call.1} parent=5 // pred_fallthru
        _
      %p205 = scmp.le.s32.totalorder 1, %s17
      %p206 = scmp.lt.s32.totalorder %s17, 3
      %p207 = pnand %p205, %p206
      %p208 = pneg %p207
      // Predicated region
      $region25: #{tpu_custom_call.1} parent=5 // pred_check
        _
      $region26: #{tpu_custom_call.1} parent=5 // pred_check_branch
        %210 = sbr.rel (%p207) target = $region28
      $region27: #{tpu_custom_call.1} parent=5 // pred_region
        %s211 = ssub.s32 %s17, 1
        %s212 = sand.u32 %s62, 1
        %s213 = scalar_lea.sflag [#allocation3], %s212
        %s214 = sand.u32 %s62, 1
        %s215 = smul.addr %s214, 64
        %s216 = scalar_lea.vmem [#allocation2], %s215
        // Predicated region
        $region29: #{tpu_custom_call.1} parent=27 // pred_check
          %p217 = pneg %p75
        $region30: #{tpu_custom_call.1} parent=27 // pred_check_branch
          %219 = sbr.rel (%p217) target = $region32
        $region31: #{tpu_custom_call.1} parent=27 // pred_region
          %220 = dma.done %s213, 1024
        $region32: #{tpu_custom_call.1} parent=27 // pred_fallthru
          _
        %s221 = sand.u32 %s94, 1
        %s222 = scalar_lea.sflag [#allocation6], %s221
        %s223 = sand.u32 %s94, 1
        %s224 = smul.addr %s223, 16
        %s225 = scalar_lea.vmem [#allocation5], %s224
        // Predicated region
        $region33: #{tpu_custom_call.1} parent=27 // pred_check
          %p226 = pneg %p107
        $region34: #{tpu_custom_call.1} parent=27 // pred_check_branch
          %228 = sbr.rel (%p226) target = $region36
        $region35: #{tpu_custom_call.1} parent=27 // pred_region
          %229 = dma.done %s222, 256
        $region36: #{tpu_custom_call.1} parent=27 // pred_fallthru
          _
        %s230 = sand.u32 %s62, 1
        %s231 = scalar_lea.sflag [#allocation3], %s230
        %s232 = sand.u32 %s62, 1
        %s233 = smul.addr %s232, 64
        %s234 = scalar_lea.vmem [#allocation2], %s233
        %p235 = pneg %p75
        %p236 = pneg %p72
        %s237 = sand.u32 %s94, 1
        %s238 = scalar_lea.sflag [#allocation6], %s237
        %s239 = sand.u32 %s94, 1
        %s240 = smul.addr %s239, 16
        %s241 = scalar_lea.vmem [#allocation5], %s240
        %p242 = pneg %p107
        %p243 = pneg %p104
        %p244 = pneg %p135
        %p245 = pneg %p132
        %s246 = sand.u32 %s122, 1
        %s247 = scalar_lea.sflag [#allocation4], %s246
        %s248 = sand.u32 %s122, 1
        %s249 = scalar_lea.vmem [#allocation7], %s248
        %s250 = sadd.s32 %s29, %s31
        %s251 = smul.u32 8, %s30
        %s252 = sadd.s32 %s29, %s31
        %s253 = smul.u32 8, %s30
        %p254 = scmp.eq.s32.totalorder %s30, 0
        %p255 = scmp.eq.s32.totalorder %s31, 0
        %p256 = pnand %p254, %p255
        %p257 = pneg %p256
        // Predicated region
        $region37: #{tpu_custom_call.1} parent=27 // pred_check
          _
        $region38: #{tpu_custom_call.1} parent=27 // pred_check_branch
          %259 = sbr.rel (%p256) target = $region40
        $region39: #{tpu_custom_call.1} parent=27 // pred_region
          %260 = vst [vmem:[%s249] sm:$0x1] 0.0
        $region40: #{tpu_custom_call.1} parent=27 // pred_fallthru
          _
        %v261 = vld [vmem:[%s225] sm:$0x3]
        %v262 = vld [vmem:[%s225 + $0x2] sm:$0x3]
        %v263 = vld [vmem:[%s225 + $0x4] sm:$0x3]
        %v264 = vld [vmem:[%s225 + $0x6] sm:$0x3]
        %v265 = vld [vmem:[%s225 + $0x8] sm:$0x3]
        %v266 = vld [vmem:[%s225 + $0xa] sm:$0x3]
        %v267 = vld [vmem:[%s225 + $0xc] sm:$0x3]
        %v268 = vld [vmem:[%s225 + $0xe] sm:$0x3]
        %vm269 = vcmp.ge.f32.partialorder %v261, 0.25
        %vm270 = vcmp.ge.f32.partialorder %v262, 0.25
        %vm271 = vcmp.ge.f32.partialorder %v263, 0.25
        %vm272 = vcmp.ge.f32.partialorder %v264, 0.25
        %vm273 = vcmp.ge.f32.partialorder %v265, 0.25
        %vm274 = vcmp.ge.f32.partialorder %v266, 0.25
        %vm275 = vcmp.ge.f32.partialorder %v267, 0.25
        %vm276 = vcmp.ge.f32.partialorder %v268, 0.25
        %vm277 = vcmp.ge.f32.partialorder %v261, 0.5
        %vm278 = vcmp.ge.f32.partialorder %v262, 0.5
        %vm279 = vcmp.ge.f32.partialorder %v263, 0.5
        %vm280 = vcmp.ge.f32.partialorder %v264, 0.5
        %vm281 = vcmp.ge.f32.partialorder %v265, 0.5
        %vm282 = vcmp.ge.f32.partialorder %v266, 0.5
        %vm283 = vcmp.ge.f32.partialorder %v267, 0.5
        %vm284 = vcmp.ge.f32.partialorder %v268, 0.5
        %vm285 = vcmp.ge.f32.partialorder %v261, 0.75
        %vm286 = vcmp.ge.f32.partialorder %v262, 0.75
        %vm287 = vcmp.ge.f32.partialorder %v263, 0.75
        %vm288 = vcmp.ge.f32.partialorder %v264, 0.75
        %vm289 = vcmp.ge.f32.partialorder %v265, 0.75
        %vm290 = vcmp.ge.f32.partialorder %v266, 0.75
        %vm291 = vcmp.ge.f32.partialorder %v267, 0.75
        %vm292 = vcmp.ge.f32.partialorder %v268, 0.75
        %v293 = vld [vmem:[%s216] sm:$0x3]
        %v294 = vld [vmem:[%s216 + $0x8] sm:$0x3]
        %v295 = vld [vmem:[%s216 + $0x10] sm:$0x3]
        %v296 = vld [vmem:[%s216 + $0x18] sm:$0x3]
        %v297 = vld [vmem:[%s216 + $0x20] sm:$0x3]
        %v298 = vld [vmem:[%s216 + $0x28] sm:$0x3]
        %v299 = vld [vmem:[%s216 + $0x30] sm:$0x3]
        %v300 = vld [vmem:[%s216 + $0x38] sm:$0x3]
        %s301 = scalar_lea.vmem %s216, 2 [#allocation2]
        %v302 = vld [vmem:[%s301] sm:$0x3]
        %v303 = vld [vmem:[%s301 + $0x8] sm:$0x3]
        %v304 = vld [vmem:[%s301 + $0x10] sm:$0x3]
        %v305 = vld [vmem:[%s301 + $0x18] sm:$0x3]
        %v306 = vld [vmem:[%s301 + $0x20] sm:$0x3]
        %v307 = vld [vmem:[%s301 + $0x28] sm:$0x3]
        %v308 = vld [vmem:[%s301 + $0x30] sm:$0x3]
        %v309 = vld [vmem:[%s301 + $0x38] sm:$0x3]
        %v310 = vmax.f32 %v293, %v302
        %v311 = vmax.f32 %v294, %v303
        %v312 = vmax.f32 %v295, %v304
        %v313 = vmax.f32 %v296, %v305
        %v314 = vmax.f32 %v297, %v306
        %v315 = vmax.f32 %v298, %v307
        %v316 = vmax.f32 %v299, %v308
        %v317 = vmax.f32 %v300, %v309
        %v318 = vsel %vm269, %v302, %v293
        %v319 = vsel %vm270, %v303, %v294
        %v320 = vsel %vm271, %v304, %v295
        %v321 = vsel %vm272, %v305, %v296
        %v322 = vsel %vm273, %v306, %v297
        %v323 = vsel %vm274, %v307, %v298
        %v324 = vsel %vm275, %v308, %v299
        %v325 = vsel %vm276, %v309, %v300
        %v326 = vsel %vm269, 2.0, 1.0
        %v327 = vsel %vm270, 2.0, 1.0
        %v328 = vsel %vm271, 2.0, 1.0
        %v329 = vsel %vm272, 2.0, 1.0
        %v330 = vsel %vm273, 2.0, 1.0
        %v331 = vsel %vm274, 2.0, 1.0
        %v332 = vsel %vm275, 2.0, 1.0
        %v333 = vsel %vm276, 2.0, 1.0
        %s334 = scalar_lea.vmem %s216, 4 [#allocation2]
        %v335 = vld [vmem:[%s334] sm:$0x3]
        %v336 = vld [vmem:[%s334 + $0x8] sm:$0x3]
        %v337 = vld [vmem:[%s334 + $0x10] sm:$0x3]
        %v338 = vld [vmem:[%s334 + $0x18] sm:$0x3]
        %v339 = vld [vmem:[%s334 + $0x20] sm:$0x3]
        %v340 = vld [vmem:[%s334 + $0x28] sm:$0x3]
        %v341 = vld [vmem:[%s334 + $0x30] sm:$0x3]
        %v342 = vld [vmem:[%s334 + $0x38] sm:$0x3]
        %v343 = vmax.f32 %v310, %v335
        %v344 = vmax.f32 %v311, %v336
        %v345 = vmax.f32 %v312, %v337
        %v346 = vmax.f32 %v313, %v338
        %v347 = vmax.f32 %v314, %v339
        %v348 = vmax.f32 %v315, %v340
        %v349 = vmax.f32 %v316, %v341
        %v350 = vmax.f32 %v317, %v342
        %v351 = vsel %vm277, %v335, %v318
        %v352 = vsel %vm278, %v336, %v319
        %v353 = vsel %vm279, %v337, %v320
        %v354 = vsel %vm280, %v338, %v321
        %v355 = vsel %vm281, %v339, %v322
        %v356 = vsel %vm282, %v340, %v323
        %v357 = vsel %vm283, %v341, %v324
        %v358 = vsel %vm284, %v342, %v325
        %v359 = vsel %vm277, 3.0, %v326
        %v360 = vsel %vm278, 3.0, %v327
        %v361 = vsel %vm279, 3.0, %v328
        %v362 = vsel %vm280, 3.0, %v329
        %v363 = vsel %vm281, 3.0, %v330
        %v364 = vsel %vm282, 3.0, %v331
        %v365 = vsel %vm283, 3.0, %v332
        %v366 = vsel %vm284, 3.0, %v333
        %s367 = scalar_lea.vmem %s216, 6 [#allocation2]
        %v368 = vld [vmem:[%s367] sm:$0x3]
        %v369 = vld [vmem:[%s367 + $0x8] sm:$0x3]
        %v370 = vld [vmem:[%s367 + $0x10] sm:$0x3]
        %v371 = vld [vmem:[%s367 + $0x18] sm:$0x3]
        %v372 = vld [vmem:[%s367 + $0x20] sm:$0x3]
        %v373 = vld [vmem:[%s367 + $0x28] sm:$0x3]
        %v374 = vld [vmem:[%s367 + $0x30] sm:$0x3]
        %v375 = vld [vmem:[%s367 + $0x38] sm:$0x3]
        %v376 = vmax.f32 %v343, %v368
        %v377 = vmax.f32 %v344, %v369
        %v378 = vmax.f32 %v345, %v370
        %v379 = vmax.f32 %v346, %v371
        %v380 = vmax.f32 %v347, %v372
        %v381 = vmax.f32 %v348, %v373
        %v382 = vmax.f32 %v349, %v374
        %v383 = vmax.f32 %v350, %v375
        %v384 = vsel %vm285, %v368, %v351
        %v385 = vsel %vm286, %v369, %v352
        %v386 = vsel %vm287, %v370, %v353
        %v387 = vsel %vm288, %v371, %v354
        %v388 = vsel %vm289, %v372, %v355
        %v389 = vsel %vm290, %v373, %v356
        %v390 = vsel %vm291, %v374, %v357
        %v391 = vsel %vm292, %v375, %v358
        %v392 = vsel %vm285, 4.0, %v359
        %v393 = vsel %vm286, 4.0, %v360
        %v394 = vsel %vm287, 4.0, %v361
        %v395 = vsel %vm288, 4.0, %v362
        %v396 = vsel %vm289, 4.0, %v363
        %v397 = vsel %vm290, 4.0, %v364
        %v398 = vsel %vm291, 4.0, %v365
        %v399 = vsel %vm292, 4.0, %v366
        %v400 = vsub.f32 %v293, %v376
        %v401 = vsub.f32 %v294, %v377
        %v402 = vsub.f32 %v295, %v378
        %v403 = vsub.f32 %v296, %v379
        %v404 = vsub.f32 %v297, %v380
        %v405 = vsub.f32 %v298, %v381
        %v406 = vsub.f32 %v299, %v382
        %v407 = vsub.f32 %v300, %v383
        %v408 = vmul.f32 %v400, 1.442695
        %v409 = vpow.pop %v408
        %v410 = vmul.f32 %v401, 1.442695
        %v411 = vpow.pop %v410
        %v412 = vmul.f32 %v402, 1.442695
        %v413 = vpow.pop %v412
        %v414 = vmul.f32 %v403, 1.442695
        %v415 = vpow.pop %v414
        %v416 = vmul.f32 %v404, 1.442695
        %v417 = vpow.pop %v416
        %v418 = vmul.f32 %v405, 1.442695
        %v419 = vpow.pop %v418
        %v420 = vmul.f32 %v406, 1.442695
        %v421 = vpow.pop %v420
        %v422 = vmul.f32 %v407, 1.442695
        %v423 = vpow.pop %v422
        %v424 = vadd.f32 %v409, 0.0
        %v425 = vadd.f32 %v411, 0.0
        %v426 = vadd.f32 %v413, 0.0
        %v427 = vadd.f32 %v415, 0.0
        %v428 = vadd.f32 %v417, 0.0
        %v429 = vadd.f32 %v419, 0.0
        %v430 = vadd.f32 %v421, 0.0
        %v431 = vadd.f32 %v423, 0.0
        %v432 = vsub.f32 %v302, %v376
        %v433 = vsub.f32 %v303, %v377
        %v434 = vsub.f32 %v304, %v378
        %v435 = vsub.f32 %v305, %v379
        %v436 = vsub.f32 %v306, %v380
        %v437 = vsub.f32 %v307, %v381
        %v438 = vsub.f32 %v308, %v382
        %v439 = vsub.f32 %v309, %v383
        %v440 = vmul.f32 %v432, 1.442695
        %v441 = vpow.pop %v440
        %v442 = vmul.f32 %v433, 1.442695
        %v443 = vpow.pop %v442
        %v444 = vmul.f32 %v434, 1.442695
        %v445 = vpow.pop %v444
        %v446 = vmul.f32 %v435, 1.442695
        %v447 = vpow.pop %v446
        %v448 = vmul.f32 %v436, 1.442695
        %v449 = vpow.pop %v448
        %v450 = vmul.f32 %v437, 1.442695
        %v451 = vpow.pop %v450
        %v452 = vmul.f32 %v438, 1.442695
        %v453 = vpow.pop %v452
        %v454 = vmul.f32 %v439, 1.442695
        %v455 = vpow.pop %v454
        %v456 = vadd.f32 %v424, %v441
        %v457 = vadd.f32 %v425, %v443
        %v458 = vadd.f32 %v426, %v445
        %v459 = vadd.f32 %v427, %v447
        %v460 = vadd.f32 %v428, %v449
        %v461 = vadd.f32 %v429, %v451
        %v462 = vadd.f32 %v430, %v453
        %v463 = vadd.f32 %v431, %v455
        %v464 = vsub.f32 %v335, %v376
        %v465 = vsub.f32 %v336, %v377
        %v466 = vsub.f32 %v337, %v378
        %v467 = vsub.f32 %v338, %v379
        %v468 = vsub.f32 %v339, %v380
        %v469 = vsub.f32 %v340, %v381
        %v470 = vsub.f32 %v341, %v382
        %v471 = vsub.f32 %v342, %v383
        %v472 = vmul.f32 %v464, 1.442695
        %v473 = vpow.pop %v472
        %v474 = vmul.f32 %v465, 1.442695
        %v475 = vpow.pop %v474
        %v476 = vmul.f32 %v466, 1.442695
        %v477 = vpow.pop %v476
        %v478 = vmul.f32 %v467, 1.442695
        %v479 = vpow.pop %v478
        %v480 = vmul.f32 %v468, 1.442695
        %v481 = vpow.pop %v480
        %v482 = vmul.f32 %v469, 1.442695
        %v483 = vpow.pop %v482
        %v484 = vmul.f32 %v470, 1.442695
        %v485 = vpow.pop %v484
        %v486 = vmul.f32 %v471, 1.442695
        %v487 = vpow.pop %v486
        %v488 = vadd.f32 %v456, %v473
        %v489 = vadd.f32 %v457, %v475
        %v490 = vadd.f32 %v458, %v477
        %v491 = vadd.f32 %v459, %v479
        %v492 = vadd.f32 %v460, %v481
        %v493 = vadd.f32 %v461, %v483
        %v494 = vadd.f32 %v462, %v485
        %v495 = vadd.f32 %v463, %v487
        %v496 = vsub.f32 %v368, %v376
        %v497 = vsub.f32 %v369, %v377
        %v498 = vsub.f32 %v370, %v378
        %v499 = vsub.f32 %v371, %v379
        %v500 = vsub.f32 %v372, %v380
        %v501 = vsub.f32 %v373, %v381
        %v502 = vsub.f32 %v374, %v382
        %v503 = vsub.f32 %v375, %v383
        %v504 = vmul.f32 %v496, 1.442695
        %v505 = vpow.pop %v504
        %v506 = vmul.f32 %v497, 1.442695
        %v507 = vpow.pop %v506
        %v508 = vmul.f32 %v498, 1.442695
        %v509 = vpow.pop %v508
        %v510 = vmul.f32 %v499, 1.442695
        %v511 = vpow.pop %v510
        %v512 = vmul.f32 %v500, 1.442695
        %v513 = vpow.pop %v512
        %v514 = vmul.f32 %v501, 1.442695
        %v515 = vpow.pop %v514
        %v516 = vmul.f32 %v502, 1.442695
        %v517 = vpow.pop %v516
        %v518 = vmul.f32 %v503, 1.442695
        %v519 = vpow.pop %v518
        %v520 = vadd.f32 %v488, %v505
        %v521 = vadd.f32 %v489, %v507
        %v522 = vadd.f32 %v490, %v509
        %v523 = vadd.f32 %v491, %v511
        %v524 = vadd.f32 %v492, %v513
        %v525 = vadd.f32 %v493, %v515
        %v526 = vadd.f32 %v494, %v517
        %v527 = vadd.f32 %v495, %v519
        %v528 = vlog2.pop %v520
        %v529 = vmul.f32 %v528, 0.6931472
        %v530 = vlog2.pop %v521
        %v531 = vmul.f32 %v530, 0.6931472
        %v532 = vlog2.pop %v522
        %v533 = vmul.f32 %v532, 0.6931472
        %v534 = vlog2.pop %v523
        %v535 = vmul.f32 %v534, 0.6931472
        %v536 = vlog2.pop %v524
        %v537 = vmul.f32 %v536, 0.6931472
        %v538 = vlog2.pop %v525
        %v539 = vmul.f32 %v538, 0.6931472
        %v540 = vlog2.pop %v526
        %v541 = vmul.f32 %v540, 0.6931472
        %v542 = vlog2.pop %v527
        %v543 = vmul.f32 %v542, 0.6931472
        %v544 = vadd.f32 %v376, %v529
        %v545 = vadd.f32 %v377, %v531
        %v546 = vadd.f32 %v378, %v533
        %v547 = vadd.f32 %v379, %v535
        %v548 = vadd.f32 %v380, %v537
        %v549 = vadd.f32 %v381, %v539
        %v550 = vadd.f32 %v382, %v541
        %v551 = vadd.f32 %v383, %v543
        %v552 = vsub.f32 %v544, %v384
        %v553 = vsub.f32 %v545, %v385
        %v554 = vsub.f32 %v546, %v386
        %v555 = vsub.f32 %v547, %v387
        %v556 = vsub.f32 %v548, %v388
        %v557 = vsub.f32 %v549, %v389
        %v558 = vsub.f32 %v550, %v390
        %v559 = vsub.f32 %v551, %v391
        %v560 = vmul.f32 %v552, %v392
        %v561 = vmul.f32 %v553, %v393
        %v562 = vmul.f32 %v554, %v394
        %v563 = vmul.f32 %v555, %v395
        %v564 = vmul.f32 %v556, %v396
        %v565 = vmul.f32 %v557, %v397
        %v566 = vmul.f32 %v558, %v398
        %v567 = vmul.f32 %v559, %v399
        %vm568 = vcmask 1041408
        %v569 = vsel %vm568, %v560, 0.0
        %v570 = vrot.slane %v569, 4
        %v571 = vadd.f32 %v569, %v570
        %v572 = vrot.slane %v571, 2
        %v573 = vadd.f32 %v571, %v572
        %v574 = vrot.slane %v573, 1
        %v575 = vadd.f32 %v573, %v574
        %v576 = vsel %vm568, %v561, 0.0
        %v577 = vrot.slane %v576, 4
        %v578 = vadd.f32 %v576, %v577
        %v579 = vrot.slane %v578, 2
        %v580 = vadd.f32 %v578, %v579
        %v581 = vrot.slane %v580, 1
        %v582 = vadd.f32 %v580, %v581
        %v583 = vsel %vm568, %v562, 0.0
        %v584 = vrot.slane %v583, 4
        %v585 = vadd.f32 %v583, %v584
        %v586 = vrot.slane %v585, 2
        %v587 = vadd.f32 %v585, %v586
        %v588 = vrot.slane %v587, 1
        %v589 = vadd.f32 %v587, %v588
        %v590 = vsel %vm568, %v563, 0.0
        %v591 = vrot.slane %v590, 4
        %v592 = vadd.f32 %v590, %v591
        %v593 = vrot.slane %v592, 2
        %v594 = vadd.f32 %v592, %v593
        %v595 = vrot.slane %v594, 1
        %v596 = vadd.f32 %v594, %v595
        %v597 = vsel %vm568, %v564, 0.0
        %v598 = vrot.slane %v597, 4
        %v599 = vadd.f32 %v597, %v598
        %v600 = vrot.slane %v599, 2
        %v601 = vadd.f32 %v599, %v600
        %v602 = vrot.slane %v601, 1
        %v603 = vadd.f32 %v601, %v602
        %v604 = vsel %vm568, %v565, 0.0
        %v605 = vrot.slane %v604, 4
        %v606 = vadd.f32 %v604, %v605
        %v607 = vrot.slane %v606, 2
        %v608 = vadd.f32 %v606, %v607
        %v609 = vrot.slane %v608, 1
        %v610 = vadd.f32 %v608, %v609
        %v611 = vsel %vm568, %v566, 0.0
        %v612 = vrot.slane %v611, 4
        %v613 = vadd.f32 %v611, %v612
        %v614 = vrot.slane %v613, 2
        %v615 = vadd.f32 %v613, %v614
        %v616 = vrot.slane %v615, 1
        %v617 = vadd.f32 %v615, %v616
        %v618 = vsel %vm568, %v567, 0.0
        %v619 = vrot.slane %v618, 4
        %v620 = vadd.f32 %v618, %v619
        %v621 = vrot.slane %v620, 2
        %v622 = vadd.f32 %v620, %v621
        %v623 = vrot.slane %v622, 1
        %v624 = vadd.f32 %v622, %v623
        %v625 = vlaneseq
        %v626 = vshrl.u32 %v625, 7
        %s627 = smul.u32 %s30, 8
        %v628 = vstv %s627
        %v629 = vadd.s32 %v626, %v628
        %v630 = vcvt.s32.f32 %v629
        %v631 = vmul.f32 %v630, 0.1
        %v632 = vadd.f32 %v631, 1.0
        %v634 = vrot.slane %v632, 1
        %v635 = vrot.slane %v632, 2
        %v636 = vrot.slane %v632, 3
        %v637 = vrot.slane %v632, 4
        %v638 = vrot.slane %v632, 5
        %v639 = vrot.slane %v632, 6
        %v640 = vrot.slane %v632, 7
        %v649 = vmul.f32 %v575, %v632
        %v650 = vmul.f32 %v582, %v634
        %v651 = vmul.f32 %v589, %v635
        %v652 = vmul.f32 %v596, %v636
        %v653 = vmul.f32 %v603, %v637
        %v654 = vmul.f32 %v610, %v638
        %v655 = vmul.f32 %v617, %v639
        %v656 = vmul.f32 %v624, %v640
        %v657 = vld [vmem:[%s249] sm:$0x1]
        %v666 = vrot.slane %v650, 7
        %vm667 = vcmask 1041409
        %v668 = vsel %vm667, %v666, %v649
        %v669 = vrot.slane %v651, 6
        %vm670 = vcmask 1042434
        %v671 = vsel %vm670, %v669, %v668
        %v672 = vrot.slane %v652, 5
        %vm673 = vcmask 1043459
        %v674 = vsel %vm673, %v672, %v671
        %v675 = vrot.slane %v653, 4
        %vm676 = vcmask 1044484
        %v677 = vsel %vm676, %v675, %v674
        %v678 = vrot.slane %v654, 3
        %vm679 = vcmask 1045509
        %v680 = vsel %vm679, %v678, %v677
        %v681 = vrot.slane %v655, 2
        %vm682 = vcmask 1046534
        %v683 = vsel %vm682, %v681, %v680
        %v684 = vrot.slane %v656, 1
        %vm685 = vcmask 1047559
        %v686 = vsel %vm685, %v684, %v683
        %v688 = vrot.slane %v686, 4
        %v689 = vadd.f32 %v686, %v688
        %v690 = vrot.slane %v689, 2
        %v691 = vadd.f32 %v689, %v690
        %v692 = vrot.slane %v691, 1
        %v693 = vadd.f32 %v691, %v692
        %v694 = vadd.f32 %v657, %v693
        %695 = vst [vmem:[%s249] sm:$0x1] %v694
        %s696 = sand.u32 %s122, 1
        %s697 = scalar_lea.sflag [#allocation4], %s696
        %s698 = sand.u32 %s122, 1
        %s699 = scalar_lea.vmem [#allocation7], %s698
        // Predicated region
        $region41: #{tpu_custom_call.1} parent=27 // pred_check
          %p700 = pneg %p132
        $region42: #{tpu_custom_call.1} parent=27 // pred_check_branch
          %702 = sbr.rel (%p700) target = $region44
        $region43: #{tpu_custom_call.1} parent=27 // pred_region
          %s704 = ssub.s32 16, 16
          %705 = vsyncadd %s697, %s704
          %s706 = sadd.s32 %s29, %s28
          %s707 = smul.addr %s706, 16
          %s708 = scalar_lea.hbm %s2, %s707
          %s710 = sshll.u32 %s699, 4
          %s711 = int_to_ptr.vmem [resolvable:$true] %s710
          %713 = dma.vmem_to_hbm [thread:$0]  %s711, 16, %s708, %s697
        $region44: #{tpu_custom_call.1} parent=27 // pred_fallthru
          _
      $region28: #{tpu_custom_call.1} parent=5 // pred_fallthru
        _
      %p714 = scmp.le.s32.totalorder 2, %s17
      // Predicated region
      $region45: #{tpu_custom_call.1} parent=5 // pred_check
        %p715 = pneg %p714
      $region46: #{tpu_custom_call.1} parent=5 // pred_check_branch
        %717 = sbr.rel (%p715) target = $region48
      $region47: #{tpu_custom_call.1} parent=5 // pred_region
        %s718 = ssub.s32 %s17, 2
        // Predicated region
        $region49: #{tpu_custom_call.1} parent=47 // pred_check
          %p719 = pneg %p138
        $region50: #{tpu_custom_call.1} parent=47 // pred_check_branch
          %721 = sbr.rel (%p719) target = $region52
        $region51: #{tpu_custom_call.1} parent=47 // pred_region
          %s722 = sand.u32 %s123, 1
          %s723 = scalar_lea.sflag [#allocation4], %s722
          %s724 = sand.u32 %s123, 1
          %s725 = scalar_lea.vmem [#allocation7], %s724
          %726 = dma.done %s723, 16
        $region52: #{tpu_custom_call.1} parent=47 // pred_fallthru
          _
      $region48: #{tpu_custom_call.1} parent=5 // pred_fallthru
        _
    $region6: #{tpu_custom_call.1} parent=1 // loop_footer
      %s21 = sadd.s32 1, %s17
    $region7: #{tpu_custom_call.1} parent=1 // loop_footer_branch
      %16 = sbr.rel target = $region3
    $region8: #{tpu_custom_call.1} parent=1 // loop_exit
      _
    %727 = vsyncpa [#allocation3], 1
    %s728 = scalar_lea.sflag [#allocation3], 1
    %729 = vsyncpa %s728, 1
    %730 = vsyncpa [#allocation6], 1
    %s731 = scalar_lea.sflag [#allocation6], 1
    %732 = vsyncpa %s731, 1
    %733 = vsyncpa [#allocation4], 1
    %s734 = scalar_lea.sflag [#allocation4], 1
    %735 = vsyncpa %s734, 1

</llo_original>
